<compile_context>
chip_gen: v7x
topology: tpu7x:2x2x1
jax: 0.10.0
libtpu: 0.0.40
codegen_flags: <defaults>
</compile_context>

<pallas_src>
import functools

import jax
import jax.numpy as jnp
from jax.experimental import pallas as pl
from jax.experimental.pallas import tpu as pltpu


def fused_forward_kernel(x_ref, fwp_ref, cw_ref, b_ref, o_ref):
    # x_ref:   (N, Cin, H, W)   input activations
    # fwp_ref: (N, W, K)        W-pool folded into fc weight (fc_w[k, w//7]/49)
    # cw_ref:  (N, Cout, Cin)   1x1-conv channel-mix weights (batch-broadcast)
    # b_ref:   (Cout, K)        conv bias folded through pool+fc, plus fc bias
    # o_ref:   (N, Cout, K)
    # Separable average pool, H direction: 7 row adds (pure vector adds).
    xs = jnp.sum(x_ref[...], axis=2)                                    # (N, Cin, W)
    # W-direction pool + Linear fused into one small batched matmul.
    y = jnp.einsum("ncw,nwk->nck", xs, fwp_ref[...],
                   preferred_element_type=jnp.float32)                  # (N, Cin, K)
    # 1x1-conv channel mix as a batched contraction (no block-diagonal kron).
    out = jnp.einsum("noc,nck->nok", cw_ref[...], y,
                     preferred_element_type=jnp.float32)                # (N, Cout, K)
    o_ref[...] = out + b_ref[...][None, :, :]


def prepare_params(conv_w, conv_b, fc_w, fc_b, *, batch, width, pool_k=7):
    """Weight-only preprocessing — computed ONCE at init, not per forward."""
    Cout, Cin = conv_w.shape[0], conv_w.shape[1]
    K, WP = fc_w.shape
    assert width == WP * pool_k, "Linear in_features must match pooled width"

    fc_w32 = fc_w.astype(jnp.float32)
    # fwp[w, k] = fc_w[k, w // pool_k] / (pool_k * pool_k)   -> (W, K)
    fwp = jnp.repeat(fc_w32.T / float(pool_k * pool_k), pool_k, axis=0)
    fwp_b = jnp.tile(fwp[None, :, :], (batch, 1, 1))                    # (N, W, K)

    cw = conv_w.reshape(Cout, Cin).astype(jnp.float32)
    cw_b = jnp.tile(cw[None, :, :], (batch, 1, 1))                      # (N, Cout, Cin)

    # Conv bias passes unchanged through the average pool, then through fc:
    #   bias[o, k] = conv_b[o] * sum_j fc_w[k, j] + fc_b[k]
    bias = (conv_b.astype(jnp.float32)[:, None] * fc_w32.sum(axis=1)[None, :]
            + fc_b.astype(jnp.float32)[None, :])                        # (Cout, K)
    return fwp_b, cw_b, bias


@functools.partial(jax.jit, static_argnames=("pool_k",))
def model_forward(x, fwp_b, cw_b, bias, *, pool_k=7):
    N, Cin, H, W = x.shape
    assert H == pool_k, "fused kernel assumes a single pooled row (H == pool kernel)"
    Cout = cw_b.shape[1]
    K = bias.shape[1]

    # TODO(synk): F.interpolate(mode='linear') on a 4D tensor (with neither size
    # nor scale_factor) raises in PyTorch; modeled here as an identity resample.

    flops = (N * Cin * (H - 1) * W            # H-direction pool sum
             + 2 * N * Cin * W * K            # pooled-fc batched matmul
             + 2 * N * Cout * Cin * K         # channel mix
             + N * Cout * K)                  # bias add
    bytes_accessed = 4 * (x.size + fwp_b.size + cw_b.size + bias.size + N * Cout * K)

    out = pl.pallas_call(
        fused_forward_kernel,
        out_shape=jax.ShapeDtypeStruct((N, Cout, K), jnp.float32),
        in_specs=[pl.BlockSpec(memory_space=pltpu.MemorySpace.VMEM)] * 4,
        out_specs=pl.BlockSpec(memory_space=pltpu.MemorySpace.VMEM),
        cost_estimate=pl.CostEstimate(flops=flops, transcendentals=0,
                                      bytes_accessed=bytes_accessed),
    )(x.astype(jnp.float32), fwp_b, cw_b, bias)

    # PyTorch result shape: (N, Cout, H // 7, 10)
    return out.reshape(N, Cout, H // pool_k, K)


def reference_forward(x, conv_w, conv_b, fc_w, fc_b, *, pool_k=7):
    """Plain-JAX reference of the same semantics (for the correctness check)."""
    N, Cin, H, W = x.shape
    Cout = conv_w.shape[0]
    conv = jnp.einsum("nchw,oc->nohw", x, conv_w.reshape(Cout, Cin))
    conv = conv + conv_b[None, :, None, None]
    pooled = conv.reshape(N, Cout, H // pool_k, pool_k, W // pool_k, pool_k).mean(axis=(3, 5))
    return jnp.einsum("ncij,kj->ncik", pooled, fc_w) + fc_b


if __name__ == "__main__":
    # Shapes implied by the forward: Conv2d(2->3, 1x1), avg_pool 7x7/7, Linear(32->10)
    # => pooled width must be 32, so W = 7*32 = 224; H = 7 gives one pooled row.
    N, Cin, H, W = 2, 2, 7, 224

    key = jax.random.PRNGKey(0)
    kx, kcw, kcb, kfw, kfb = jax.random.split(key, 5)

    x = jax.random.normal(kx, (N, Cin, H, W), dtype=jnp.float32)
    conv_w = jax.random.normal(kcw, (3, 2, 1, 1), dtype=jnp.float32)   # Conv2d(2,3,1).weight
    conv_b = jax.random.normal(kcb, (3,), dtype=jnp.float32) * 0.1     # Conv2d(2,3,1).bias
    fc_w = jax.random.normal(kfw, (10, 32), dtype=jnp.float32)         # Linear(32,10).weight
    fc_b = jax.random.normal(kfb, (10,), dtype=jnp.float32)            # Linear(32,10).bias

    # Weight-only preprocessing, done once (hoisted out of the per-call path).
    fwp_b, cw_b, bias = prepare_params(conv_w, conv_b, fc_w, fc_b, batch=N, width=W)

    out = model_forward(x, fwp_b, cw_b, bias)
    out = jax.block_until_ready(out)

    ref = reference_forward(x, conv_w, conv_b, fc_w, fc_b)
    assert out.shape == (N, 3, 1, 10), out.shape
    assert jnp.allclose(out, ref, atol=1e-4, rtol=1e-4), float(jnp.max(jnp.abs(out - ref)))

    print("KERNEL_OK")
</pallas_src>

<mosaic_0001>
module attributes {stable_mosaic.version = 11 : i64} {
  func.func @fused_forward_kernel(%arg0: memref<2x2x7x224xf32, #tpu.memory_space<vmem>>, %arg1: memref<2x224x10xf32, #tpu.memory_space<vmem>>, %arg2: memref<2x3x2xf32, #tpu.memory_space<vmem>>, %arg3: memref<3x10xf32, #tpu.memory_space<vmem>>, %arg4: memref<2x3x10xf32, #tpu.memory_space<vmem>>) attributes {dimension_semantics = [], scalar_prefetch = 0 : i64, scratch_operands = 0 : i64, tpu.core_type = #tpu.core_type<tc>} {
    %c0 = arith.constant 0 : index
    %c0_0 = arith.constant 0 : index
    %c0_1 = arith.constant 0 : index
    %c0_2 = arith.constant 0 : index
    %0 = vector.load %arg0[%c0, %c0_0, %c0_1, %c0_2] : memref<2x2x7x224xf32, #tpu.memory_space<vmem>>, vector<2x2x7x224xf32>
    %cst = arith.constant dense<0.000000e+00> : vector<2x2x224xf32>
    %1 = vector.multi_reduction <add>, %0, %cst [2] : vector<2x2x7x224xf32> to vector<2x2x224xf32>
    %c0_3 = arith.constant 0 : index
    %c0_4 = arith.constant 0 : index
    %c0_5 = arith.constant 0 : index
    %2 = vector.load %arg1[%c0_3, %c0_4, %c0_5] : memref<2x224x10xf32, #tpu.memory_space<vmem>>, vector<2x224x10xf32>
    "tpu.trace_start"() <{level = 10 : i32, message = "ncw,nwk->nck"}> : () -> ()
    %cst_6 = arith.constant dense<0.000000e+00> : vector<2x2x10xf32>
    %3 = tpu.matmul %1, %2, %cst_6 {dimension_numbers = #tpu.dot_dimension_numbers<[2], [1], [1], [2], [0, 0, 0, 1, 1, 2], [0], [0]>} : vector<2x2x224xf32>, vector<2x224x10xf32>, vector<2x2x10xf32> -> vector<2x2x10xf32>
    "tpu.trace_stop"() : () -> ()
    %c0_7 = arith.constant 0 : index
    %c0_8 = arith.constant 0 : index
    %c0_9 = arith.constant 0 : index
    %4 = vector.load %arg2[%c0_7, %c0_8, %c0_9] : memref<2x3x2xf32, #tpu.memory_space<vmem>>, vector<2x3x2xf32>
    "tpu.trace_start"() <{level = 10 : i32, message = "noc,nck->nok"}> : () -> ()
    %cst_10 = arith.constant dense<0.000000e+00> : vector<2x3x10xf32>
    %5 = tpu.matmul %4, %3, %cst_10 {dimension_numbers = #tpu.dot_dimension_numbers<[2], [1], [1], [2], [0, 0, 0, 1, 1, 2], [0], [0]>} : vector<2x3x2xf32>, vector<2x2x10xf32>, vector<2x3x10xf32> -> vector<2x3x10xf32>
    "tpu.trace_stop"() : () -> ()
    %c0_11 = arith.constant 0 : index
    %c0_12 = arith.constant 0 : index
    %6 = vector.load %arg3[%c0_11, %c0_12] : memref<3x10xf32, #tpu.memory_space<vmem>>, vector<3x10xf32>
    %7 = vector.shape_cast %6 : vector<3x10xf32> to vector<1x3x10xf32>
    %8 = vector.broadcast %7 : vector<1x3x10xf32> to vector<2x3x10xf32>
    %9 = arith.addf %5, %8 : vector<2x3x10xf32>
    %c0_13 = arith.constant 0 : index
    %c0_14 = arith.constant 0 : index
    %c0_15 = arith.constant 0 : index
    %10 = vector.load %arg4[%c0_13, %c0_14, %c0_15] : memref<2x3x10xf32, #tpu.memory_space<vmem>>, vector<2x3x10xf32>
    tpu.vector_store %arg4[%c0_13, %c0_14, %c0_15], %9 {strides = array<i32>} : memref<2x3x10xf32, #tpu.memory_space<vmem>>, vector<2x3x10xf32>,
    return
  }
}

</mosaic_0001>

<llo_original>
// kernel: model_forward.1
$region0: #{model_forward.1}
  #allocation0 [shape = 'u32[]', space=smem, size = 0x4, offset = 0x4, fixed_abs, tag = 'smem constant byte address 0x4 - core index']
  #allocation1 [shape = 'u32[144,128]{1,0:T(1,128)}', space=vmem, size = 0x12000, scoped, tag = 'internal scratch']
  %s0 = inlined_call_operand.vmem [shape: f32[2,2,7,224], index: 0, kind: input, shape index: {}]
  %s1 = inlined_call_operand.vmem [shape: f32[2,224,10], index: 1, kind: input, shape index: {}]
  %s2 = inlined_call_operand.vmem [shape: f32[2,3,2], index: 2, kind: input, shape index: {}]
  %s3 = inlined_call_operand.vmem [shape: f32[3,10], index: 3, kind: input, shape index: {}]
  %s4 = inlined_call_operand.vmem [shape: f32[2,3,10], index: 4, kind: output, shape index: {}]
  %s5 = sld [smem:[#allocation0]]
  $region26: #{model_forward.1} parent=0
    _
  %s7 = ssub.s32 1, %s5
  %s8 = scalar_select 0, %s7, %s5
  // Predicated region
  $region2: #{model_forward.1} parent=0 // pred_check
    _
  $region3: #{model_forward.1} parent=0 // pred_check_branch
    %10 = sbr.rel (0) target = $region5
  $region4: #{model_forward.1} parent=0 // pred_region
    _
  $region5: #{model_forward.1} parent=0 // pred_fallthru
    _
  // Predicated region
  $region6: #{model_forward.1} parent=0 // pred_check
    _
  $region7: #{model_forward.1} parent=0 // pred_check_branch
    %12 = sbr.rel (0) target = $region9
  $region8: #{model_forward.1} parent=0 // pred_region
    _
  $region9: #{model_forward.1} parent=0 // pred_fallthru
    _
  // Predicated region
  $region10: #{model_forward.1} parent=0 // pred_check
    _
  $region11: #{model_forward.1} parent=0 // pred_check_branch
    %14 = sbr.rel (0) target = $region13
  $region12: #{model_forward.1} parent=0 // pred_region
    _
  $region13: #{model_forward.1} parent=0 // pred_fallthru
    _
  // Predicated region
  $region14: #{model_forward.1} parent=0 // pred_check
    _
  $region15: #{model_forward.1} parent=0 // pred_check_branch
    %16 = sbr.rel (0) target = $region17
  $region16: #{model_forward.1} parent=0 // pred_region
    _
  $region17: #{model_forward.1} parent=0 // pred_fallthru
    _
  %v17 = vld [vmem:[%s0] sm:$0x7f]
  %v18 = vld [vmem:[%s0 + $0x8] sm:$0x7f]
  %v19 = vld [vmem:[%s0 + $0x10] sm:$0x7f]
  %v20 = vld [vmem:[%s0 + $0x18] sm:$0x7f]
  %v21 = vld [vmem:[%s0 + $0x20] sm:$0x7f]
  %v22 = vld [vmem:[%s0 + $0x28] sm:$0x7f]
  %v23 = vld [vmem:[%s0 + $0x30] sm:$0x7f]
  %v24 = vld [vmem:[%s0 + $0x38] sm:$0x7f]
  %vm25 = vcmask 1046528
  %v26 = vsel %vm25, %v17, 0.0
  %v27 = vrot.slane %v26, 4
  %v28 = vadd.f32 %v26, %v27
  %v29 = vrot.slane %v28, 2
  %v30 = vadd.f32 %v28, %v29
  %v31 = vrot.slane %v30, 1
  %v32 = vadd.f32 %v30, %v31
  %vm33 = vcmask 784384
  %v34 = vsel %vm33, %v18, 0.0
  %v35 = vrot.slane %v34, 4
  %v36 = vadd.f32 %v34, %v35
  %v37 = vrot.slane %v36, 2
  %v38 = vadd.f32 %v36, %v37
  %v39 = vrot.slane %v38, 1
  %v40 = vadd.f32 %v38, %v39
  %v41 = vsel %vm25, %v19, 0.0
  %v42 = vrot.slane %v41, 4
  %v43 = vadd.f32 %v41, %v42
  %v44 = vrot.slane %v43, 2
  %v45 = vadd.f32 %v43, %v44
  %v46 = vrot.slane %v45, 1
  %v47 = vadd.f32 %v45, %v46
  %v48 = vsel %vm33, %v20, 0.0
  %v49 = vrot.slane %v48, 4
  %v50 = vadd.f32 %v48, %v49
  %v51 = vrot.slane %v50, 2
  %v52 = vadd.f32 %v50, %v51
  %v53 = vrot.slane %v52, 1
  %v54 = vadd.f32 %v52, %v53
  %v55 = vsel %vm25, %v21, 0.0
  %v56 = vrot.slane %v55, 4
  %v57 = vadd.f32 %v55, %v56
  %v58 = vrot.slane %v57, 2
  %v59 = vadd.f32 %v57, %v58
  %v60 = vrot.slane %v59, 1
  %v61 = vadd.f32 %v59, %v60
  %v62 = vsel %vm33, %v22, 0.0
  %v63 = vrot.slane %v62, 4
  %v64 = vadd.f32 %v62, %v63
  %v65 = vrot.slane %v64, 2
  %v66 = vadd.f32 %v64, %v65
  %v67 = vrot.slane %v66, 1
  %v68 = vadd.f32 %v66, %v67
  %v69 = vsel %vm25, %v23, 0.0
  %v70 = vrot.slane %v69, 4
  %v71 = vadd.f32 %v69, %v70
  %v72 = vrot.slane %v71, 2
  %v73 = vadd.f32 %v71, %v72
  %v74 = vrot.slane %v73, 1
  %v75 = vadd.f32 %v73, %v74
  %v76 = vsel %vm33, %v24, 0.0
  %v77 = vrot.slane %v76, 4
  %v78 = vadd.f32 %v76, %v77
  %v79 = vrot.slane %v78, 2
  %v80 = vadd.f32 %v78, %v79
  %v81 = vrot.slane %v80, 1
  %v82 = vadd.f32 %v80, %v81
  %v83 = vld [vmem:[%s1] sm:$0xff]
  %v84 = vld [vmem:[%s1 + $0x8] sm:$0xff]
  %v85 = vld [vmem:[%s1 + $0x10] sm:$0xff]
  %v86 = vld [vmem:[%s1 + $0x18] sm:$0xff]
  %v87 = vld [vmem:[%s1 + $0x20] sm:$0xff]
  %v88 = vld [vmem:[%s1 + $0x28] sm:$0xff]
  %v89 = vld [vmem:[%s1 + $0x30] sm:$0xff]
  %v90 = vld [vmem:[%s1 + $0x38] sm:$0xff]
  %v91 = vld [vmem:[%s1 + $0x40] sm:$0xff]
  %v92 = vld [vmem:[%s1 + $0x48] sm:$0xff]
  %v93 = vld [vmem:[%s1 + $0x50] sm:$0xff]
  %v94 = vld [vmem:[%s1 + $0x58] sm:$0xff]
  %v95 = vld [vmem:[%s1 + $0x60] sm:$0xff]
  %v96 = vld [vmem:[%s1 + $0x68] sm:$0xff]
  %v97 = vld [vmem:[%s1 + $0x70] sm:$0xff]
  %v98 = vld [vmem:[%s1 + $0x78] sm:$0xff]
  %v99 = vld [vmem:[%s1 + $0x80] sm:$0xff]
  %v100 = vld [vmem:[%s1 + $0x88] sm:$0xff]
  %v101 = vld [vmem:[%s1 + $0x90] sm:$0xff]
  %v102 = vld [vmem:[%s1 + $0x98] sm:$0xff]
  %v103 = vld [vmem:[%s1 + $0xa0] sm:$0xff]
  %v104 = vld [vmem:[%s1 + $0xa8] sm:$0xff]
  %v105 = vld [vmem:[%s1 + $0xb0] sm:$0xff]
  %v106 = vld [vmem:[%s1 + $0xb8] sm:$0xff]
  %v107 = vld [vmem:[%s1 + $0xc0] sm:$0xff]
  %v108 = vld [vmem:[%s1 + $0xc8] sm:$0xff]
  %v109 = vld [vmem:[%s1 + $0xd0] sm:$0xff]
  %v110 = vld [vmem:[%s1 + $0xd8] sm:$0xff]
  %v111 = vld [vmem:[%s1 + $0xe0] sm:$0xff]
  %v112 = vld [vmem:[%s1 + $0xe8] sm:$0xff]
  %v113 = vld [vmem:[%s1 + $0xf0] sm:$0xff]
  %v114 = vld [vmem:[%s1 + $0xf8] sm:$0xff]
  %v115 = vld [vmem:[%s1 + $0x100] sm:$0xff]
  %v116 = vld [vmem:[%s1 + $0x108] sm:$0xff]
  %v117 = vld [vmem:[%s1 + $0x110] sm:$0xff]
  %v118 = vld [vmem:[%s1 + $0x118] sm:$0xff]
  %v119 = vld [vmem:[%s1 + $0x120] sm:$0xff]
  %v120 = vld [vmem:[%s1 + $0x128] sm:$0xff]
  %v121 = vld [vmem:[%s1 + $0x130] sm:$0xff]
  %v122 = vld [vmem:[%s1 + $0x138] sm:$0xff]
  %v123 = vld [vmem:[%s1 + $0x140] sm:$0xff]
  %v124 = vld [vmem:[%s1 + $0x148] sm:$0xff]
  %v125 = vld [vmem:[%s1 + $0x150] sm:$0xff]
  %v126 = vld [vmem:[%s1 + $0x158] sm:$0xff]
  %v127 = vld [vmem:[%s1 + $0x160] sm:$0xff]
  %v128 = vld [vmem:[%s1 + $0x168] sm:$0xff]
  %v129 = vld [vmem:[%s1 + $0x170] sm:$0xff]
  %v130 = vld [vmem:[%s1 + $0x178] sm:$0xff]
  %v131 = vld [vmem:[%s1 + $0x180] sm:$0xff]
  %v132 = vld [vmem:[%s1 + $0x188] sm:$0xff]
  %v133 = vld [vmem:[%s1 + $0x190] sm:$0xff]
  %v134 = vld [vmem:[%s1 + $0x198] sm:$0xff]
  %v135 = vld [vmem:[%s1 + $0x1a0] sm:$0xff]
  %v136 = vld [vmem:[%s1 + $0x1a8] sm:$0xff]
  %v137 = vld [vmem:[%s1 + $0x1b0] sm:$0xff]
  %v138 = vld [vmem:[%s1 + $0x1b8] sm:$0xff]
  %vm143 = vcmask 1041409
  %v144 = vsel %vm143, %v47, %v32
  %v145 = vsel %vm143, %v54, %v40
  %vm147 = vcmask 785408
  %v148 = vsel %vm147, %v145, 0
  %150 = vmatprep.subr.mxu0 0.0
  %151 = vmatpush1.msra.mxu0 %v83
  %152 = vmatprep.subr.mxu0 0.0
  %153 = vmatpush1.msra.mxu0 %v84
  %154 = vmatprep.subr.mxu0 0.0
  %155 = vmatpush1.msra.mxu0 %v85
  %156 = vmatprep.subr.mxu0 0.0
  %157 = vmatpush1.msra.mxu0 %v86
  %158 = vmatprep.subr.mxu0 0.0
  %159 = vmatpush1.msra.mxu0 %v87
  %160 = vmatprep.subr.mxu0 0.0
  %161 = vmatpush1.msra.mxu0 %v88
  %162 = vmatprep.subr.mxu0 0.0
  %163 = vmatpush1.msra.mxu0 %v89
  %164 = vmatprep.subr.mxu0 0.0
  %165 = vmatpush1.msra.mxu0 %v90
  %166 = vmatprep.subr.mxu0 0.0
  %167 = vmatpush1.msra.mxu0 %v91
  %168 = vmatprep.subr.mxu0 0.0
  %169 = vmatpush1.msra.mxu0 %v92
  %170 = vmatprep.subr.mxu0 0.0
  %171 = vmatpush1.msra.mxu0 %v93
  %172 = vmatprep.subr.mxu0 0.0
  %173 = vmatpush1.msra.mxu0 %v94
  %174 = vmatprep.subr.mxu0 0.0
  %175 = vmatpush1.msra.mxu0 %v95
  %176 = vmatprep.subr.mxu0 0.0
  %177 = vmatpush1.msra.mxu0 %v96
  %178 = vmatprep.subr.mxu0 0.0
  %179 = vmatpush1.msra.mxu0 %v97
  %180 = vmatprep.subr.mxu0 0.0
  %181 = vmatpush1.msra.mxu0 %v98
  %182 = vmatprep.subr.mxu0 0.0
  %183 = vmatpush1.msra.mxu0 %v99
  %184 = vmatprep.subr.mxu0 0.0
  %185 = vmatpush1.msra.mxu0 %v100
  %186 = vmatprep.subr.mxu0 0.0
  %187 = vmatpush1.msra.mxu0 %v101
  %188 = vmatprep.subr.mxu0 0.0
  %189 = vmatpush1.msra.mxu0 %v102
  %190 = vmatprep.subr.mxu0 0.0
  %191 = vmatpush1.msra.mxu0 %v103
  %192 = vmatprep.subr.mxu0 0.0
  %193 = vmatpush1.msra.mxu0 %v104
  %194 = vmatprep.subr.mxu0 0.0
  %195 = vmatpush1.msra.mxu0 %v105
  %196 = vmatprep.subr.mxu0 0.0
  %197 = vmatpush1.msra.mxu0 %v106
  %198 = vmatprep.subr.mxu0 0.0
  %199 = vmatpush1.msra.mxu0 %v107
  %200 = vmatprep.subr.mxu0 0.0
  %201 = vmatpush1.msra.mxu0 %v108
  %202 = vmatprep.subr.mxu0 0.0
  %203 = vmatpush1.msra.mxu0 %v109
  %204 = vmatprep.subr.mxu0 0.0
  %205 = vmatpush1.msra.mxu0 %v110
  %206 = vmatprep.subr.mxu0 0.0
  %207 = vmatpush1.msra.mxu0 0.0
  %208 = vmatprep.subr.mxu0 0.0
  %209 = vmatpush1.msra.mxu0 0.0
  %210 = vmatprep.subr.mxu0 0.0
  %211 = vmatpush1.msra.mxu0 0.0
  %212 = vmatprep.subr.mxu0 0.0
  %213 = vmatpush1.msra.mxu0 0.0
  %214 = vmatprep.mubr.f32.mxu0 %v148
  %215 = vmatmul.mubr.f32.gmra.mrb[0].mxu0 %v144
  %v216 = vpop.f32.mrb[0].mxu0
  %v217 = vadd.f32 0.0, %v216
  %v218 = vpop.f32.mrb[0].mxu0
  %219 = vdwg.mxu0
  %v224 = vsel %vm143, %v75, %v61
  %v225 = vsel %vm143, %v82, %v68
  %v227 = vsel %vm147, %v225, 0
  %229 = vmatprep.subr.mxu0 0.0
  %230 = vmatpush1.msra.mxu0 %v111
  %231 = vmatprep.subr.mxu0 0.0
  %232 = vmatpush1.msra.mxu0 %v112
  %233 = vmatprep.subr.mxu0 0.0
  %234 = vmatpush1.msra.mxu0 %v113
  %235 = vmatprep.subr.mxu0 0.0
  %236 = vmatpush1.msra.mxu0 %v114
  %237 = vmatprep.subr.mxu0 0.0
  %238 = vmatpush1.msra.mxu0 %v115
  %239 = vmatprep.subr.mxu0 0.0
  %240 = vmatpush1.msra.mxu0 %v116
  %241 = vmatprep.subr.mxu0 0.0
  %242 = vmatpush1.msra.mxu0 %v117
  %243 = vmatprep.subr.mxu0 0.0
  %244 = vmatpush1.msra.mxu0 %v118
  %245 = vmatprep.subr.mxu0 0.0
  %246 = vmatpush1.msra.mxu0 %v119
  %247 = vmatprep.subr.mxu0 0.0
  %248 = vmatpush1.msra.mxu0 %v120
  %249 = vmatprep.subr.mxu0 0.0
  %250 = vmatpush1.msra.mxu0 %v121
  %251 = vmatprep.subr.mxu0 0.0
  %252 = vmatpush1.msra.mxu0 %v122
  %253 = vmatprep.subr.mxu0 0.0
  %254 = vmatpush1.msra.mxu0 %v123
  %255 = vmatprep.subr.mxu0 0.0
  %256 = vmatpush1.msra.mxu0 %v124
  %257 = vmatprep.subr.mxu0 0.0
  %258 = vmatpush1.msra.mxu0 %v125
  %259 = vmatprep.subr.mxu0 0.0
  %260 = vmatpush1.msra.mxu0 %v126
  %261 = vmatprep.subr.mxu0 0.0
  %262 = vmatpush1.msra.mxu0 %v127
  %263 = vmatprep.subr.mxu0 0.0
  %264 = vmatpush1.msra.mxu0 %v128
  %265 = vmatprep.subr.mxu0 0.0
  %266 = vmatpush1.msra.mxu0 %v129
  %267 = vmatprep.subr.mxu0 0.0
  %268 = vmatpush1.msra.mxu0 %v130
  %269 = vmatprep.subr.mxu0 0.0
  %270 = vmatpush1.msra.mxu0 %v131
  %271 = vmatprep.subr.mxu0 0.0
  %272 = vmatpush1.msra.mxu0 %v132
  %273 = vmatprep.subr.mxu0 0.0
  %274 = vmatpush1.msra.mxu0 %v133
  %275 = vmatprep.subr.mxu0 0.0
  %276 = vmatpush1.msra.mxu0 %v134
  %277 = vmatprep.subr.mxu0 0.0
  %278 = vmatpush1.msra.mxu0 %v135
  %279 = vmatprep.subr.mxu0 0.0
  %280 = vmatpush1.msra.mxu0 %v136
  %281 = vmatprep.subr.mxu0 0.0
  %282 = vmatpush1.msra.mxu0 %v137
  %283 = vmatprep.subr.mxu0 0.0
  %284 = vmatpush1.msra.mxu0 %v138
  %285 = vmatprep.subr.mxu0 0.0
  %286 = vmatpush1.msra.mxu0 0.0
  %287 = vmatprep.subr.mxu0 0.0
  %288 = vmatpush1.msra.mxu0 0.0
  %289 = vmatprep.subr.mxu0 0.0
  %290 = vmatpush1.msra.mxu0 0.0
  %291 = vmatprep.subr.mxu0 0.0
  %292 = vmatpush1.msra.mxu0 0.0
  %293 = vmatprep.mubr.f32.mxu0 %v227
  %294 = vmatmul.mubr.f32.gmra.mrb[0].mxu0 %v224
  %v295 = vpop.f32.mrb[0].mxu0
  %v296 = vadd.f32 0.0, %v295
  %v297 = vpop.f32.mrb[0].mxu0
  %298 = vdwg.mxu0
  %v299 = vld [vmem:[%s2] sm:$0x7]
  %v300 = vld [vmem:[%s2 + $0x4] sm:$0x7]
  %v301 = vld [vmem:[%s3] sm:$0x7]
  %vm302 = vcmask 15360
  %v304 = vsel %vm302, %v299, 0
  %vm306 = vcmask 1041408
  %v308 = vsel %vm306, %v217, 0
  %310 = vmatprep.subr.mxu0 0.0
  %311 = vmatpush1.msra.mxu0 %v308
  %312 = vmatprep.subr.mxu0 0.0
  %313 = vmatpush1.msra.mxu0 0.0
  %314 = vmatprep.subr.mxu0 0.0
  %315 = vmatpush1.msra.mxu0 0.0
  %316 = vmatprep.subr.mxu0 0.0
  %317 = vmatpush1.msra.mxu0 0.0
  %318 = vmatprep.subr.mxu0 0.0
  %319 = vmatpush1.msra.mxu0 0.0
  %320 = vmatprep.subr.mxu0 0.0
  %321 = vmatpush1.msra.mxu0 0.0
  %322 = vmatprep.subr.mxu0 0.0
  %323 = vmatpush1.msra.mxu0 0.0
  %324 = vmatprep.subr.mxu0 0.0
  %325 = vmatpush1.msra.mxu0 0.0
  %326 = vmatprep.subr.mxu0 0.0
  %327 = vmatpush1.msra.mxu0 0.0
  %328 = vmatprep.subr.mxu0 0.0
  %329 = vmatpush1.msra.mxu0 0.0
  %330 = vmatprep.subr.mxu0 0.0
  %331 = vmatpush1.msra.mxu0 0.0
  %332 = vmatprep.subr.mxu0 0.0
  %333 = vmatpush1.msra.mxu0 0.0
  %334 = vmatprep.subr.mxu0 0.0
  %335 = vmatpush1.msra.mxu0 0.0
  %336 = vmatprep.subr.mxu0 0.0
  %337 = vmatpush1.msra.mxu0 0.0
  %338 = vmatprep.subr.mxu0 0.0
  %339 = vmatpush1.msra.mxu0 0.0
  %340 = vmatprep.subr.mxu0 0.0
  %341 = vmatpush1.msra.mxu0 0.0
  %342 = vmatprep.subr.mxu0 0.0
  %343 = vmatpush1.msra.mxu0 0.0
  %344 = vmatprep.subr.mxu0 0.0
  %345 = vmatpush1.msra.mxu0 0.0
  %346 = vmatprep.subr.mxu0 0.0
  %347 = vmatpush1.msra.mxu0 0.0
  %348 = vmatprep.subr.mxu0 0.0
  %349 = vmatpush1.msra.mxu0 0.0
  %350 = vmatprep.subr.mxu0 0.0
  %351 = vmatpush1.msra.mxu0 0.0
  %352 = vmatprep.subr.mxu0 0.0
  %353 = vmatpush1.msra.mxu0 0.0
  %354 = vmatprep.subr.mxu0 0.0
  %355 = vmatpush1.msra.mxu0 0.0
  %356 = vmatprep.subr.mxu0 0.0
  %357 = vmatpush1.msra.mxu0 0.0
  %358 = vmatprep.subr.mxu0 0.0
  %359 = vmatpush1.msra.mxu0 0.0
  %360 = vmatprep.subr.mxu0 0.0
  %361 = vmatpush1.msra.mxu0 0.0
  %362 = vmatprep.subr.mxu0 0.0
  %363 = vmatpush1.msra.mxu0 0.0
  %364 = vmatprep.subr.mxu0 0.0
  %365 = vmatpush1.msra.mxu0 0.0
  %366 = vmatprep.subr.mxu0 0.0
  %367 = vmatpush1.msra.mxu0 0.0
  %368 = vmatprep.subr.mxu0 0.0
  %369 = vmatpush1.msra.mxu0 0.0
  %370 = vmatprep.subr.mxu0 0.0
  %371 = vmatpush1.msra.mxu0 0.0
  %372 = vmatprep.subr.mxu0 0.0
  %373 = vmatpush1.msra.mxu0 0.0
  %374 = vmatprep.mubr.f32.mxu0 0.0
  %375 = vmatmul.mubr.f32.gmra.mrb[0].mxu0 %v304
  %v376 = vpop.f32.mrb[0].mxu0
  %v377 = vadd.f32 %v301, %v376
  %v378 = vpop.f32.mrb[0].mxu0
  %379 = vdwg.mxu0
  %v381 = vsel %vm302, %v300, 0
  %v384 = vsel %vm306, %v296, 0
  %386 = vmatprep.subr.mxu0 0.0
  %387 = vmatpush1.msra.mxu0 %v384
  %388 = vmatprep.subr.mxu0 0.0
  %389 = vmatpush1.msra.mxu0 0.0
  %390 = vmatprep.subr.mxu0 0.0
  %391 = vmatpush1.msra.mxu0 0.0
  %392 = vmatprep.subr.mxu0 0.0
  %393 = vmatpush1.msra.mxu0 0.0
  %394 = vmatprep.subr.mxu0 0.0
  %395 = vmatpush1.msra.mxu0 0.0
  %396 = vmatprep.subr.mxu0 0.0
  %397 = vmatpush1.msra.mxu0 0.0
  %398 = vmatprep.subr.mxu0 0.0
  %399 = vmatpush1.msra.mxu0 0.0
  %400 = vmatprep.subr.mxu0 0.0
  %401 = vmatpush1.msra.mxu0 0.0
  %402 = vmatprep.subr.mxu0 0.0
  %403 = vmatpush1.msra.mxu0 0.0
  %404 = vmatprep.subr.mxu0 0.0
  %405 = vmatpush1.msra.mxu0 0.0
  %406 = vmatprep.subr.mxu0 0.0
  %407 = vmatpush1.msra.mxu0 0.0
  %408 = vmatprep.subr.mxu0 0.0
  %409 = vmatpush1.msra.mxu0 0.0
  %410 = vmatprep.subr.mxu0 0.0
  %411 = vmatpush1.msra.mxu0 0.0
  %412 = vmatprep.subr.mxu0 0.0
  %413 = vmatpush1.msra.mxu0 0.0
  %414 = vmatprep.subr.mxu0 0.0
  %415 = vmatpush1.msra.mxu0 0.0
  %416 = vmatprep.subr.mxu0 0.0
  %417 = vmatpush1.msra.mxu0 0.0
  %418 = vmatprep.subr.mxu0 0.0
  %419 = vmatpush1.msra.mxu0 0.0
  %420 = vmatprep.subr.mxu0 0.0
  %421 = vmatpush1.msra.mxu0 0.0
  %422 = vmatprep.subr.mxu0 0.0
  %423 = vmatpush1.msra.mxu0 0.0
  %424 = vmatprep.subr.mxu0 0.0
  %425 = vmatpush1.msra.mxu0 0.0
  %426 = vmatprep.subr.mxu0 0.0
  %427 = vmatpush1.msra.mxu0 0.0
  %428 = vmatprep.subr.mxu0 0.0
  %429 = vmatpush1.msra.mxu0 0.0
  %430 = vmatprep.subr.mxu0 0.0
  %431 = vmatpush1.msra.mxu0 0.0
  %432 = vmatprep.subr.mxu0 0.0
  %433 = vmatpush1.msra.mxu0 0.0
  %434 = vmatprep.subr.mxu0 0.0
  %435 = vmatpush1.msra.mxu0 0.0
  %436 = vmatprep.subr.mxu0 0.0
  %437 = vmatpush1.msra.mxu0 0.0
  %438 = vmatprep.subr.mxu0 0.0
  %439 = vmatpush1.msra.mxu0 0.0
  %440 = vmatprep.subr.mxu0 0.0
  %441 = vmatpush1.msra.mxu0 0.0
  %442 = vmatprep.subr.mxu0 0.0
  %443 = vmatpush1.msra.mxu0 0.0
  %444 = vmatprep.subr.mxu0 0.0
  %445 = vmatpush1.msra.mxu0 0.0
  %446 = vmatprep.subr.mxu0 0.0
  %447 = vmatpush1.msra.mxu0 0.0
  %448 = vmatprep.subr.mxu0 0.0
  %449 = vmatpush1.msra.mxu0 0.0
  %450 = vmatprep.mubr.f32.mxu0 0.0
  %451 = vmatmul.mubr.f32.gmra.mrb[0].mxu0 %v381
  %v452 = vpop.f32.mrb[0].mxu0
  %v453 = vadd.f32 %v301, %v452
  %v454 = vpop.f32.mrb[0].mxu0
  %455 = vdwg.mxu0
  %vm456 = vcmask 75776
  %457 = vst.msk [vmem:[%s4] sm:$0x7] %vm456, %v377
  %458 = vst.msk [vmem:[%s4 + $0x4] sm:$0x7] %vm456, %v453
  // Predicated region
  $region18: #{model_forward.1} parent=0 // pred_check
    _
  $region19: #{model_forward.1} parent=0 // pred_check_branch
    %460 = sbr.rel (0) target = $region21
  $region20: #{model_forward.1} parent=0 // pred_region
    _
  $region21: #{model_forward.1} parent=0 // pred_fallthru
    _
  // Predicated region
  $region22: #{model_forward.1} parent=0 // pred_check
    _
  $region23: #{model_forward.1} parent=0 // pred_check_branch
    %462 = sbr.rel (0) target = $region25
  $region24: #{model_forward.1} parent=0 // pred_region
    _
  $region25: #{model_forward.1} parent=0 // pred_fallthru
    _

</llo_original>
